<compile_context>
chip_gen: v7x
topology: tpu7x:2x2x1
jax: 0.10.0
libtpu: 0.0.40
codegen_flags: <defaults>
</compile_context>

<pallas_src>
import functools
import math

import jax
import jax.numpy as jnp
from jax.experimental import pallas as pl
from jax.experimental.pallas import tpu as pltpu

LANE = 128  # TPU lane width: feature dims padded to multiples of 128


def _round_up(x, m):
    return ((x + m - 1) // m) * m


def _vmem_capacity_bytes():
    """Physical per-core VMEM (64 MiB on v7x, 128 MiB on v5e/v6e)."""
    try:
        get_info = getattr(pltpu, "get_tpu_info", None)
        if get_info is not None:
            cap = getattr(get_info(), "vmem_capacity_bytes", None)
            if cap:
                return int(cap)
    except Exception:
        pass
    return 64 << 20  # conservative fallback (v7x)


def sequential_mlp_kernel(x_ref, w1_ref, b1_ref, w2_ref, b2_ref, w3_ref, b3_ref,
                          o_ref):
    """Fused tanh(relu(relu(x@W1+b1)@W2+b2)@W3+b3) for one batch tile.

    Weights are already in the MXU compute dtype (bf16 or f32); activations are
    cast per layer.  Matmuls accumulate in f32 on the MXU; the elementwise
    epilogue (bias add, ReLU, tanh) stays in f32 (v5e has no bf16 VPU/EUP).
    """
    cd = w1_ref.dtype

    # Layer 1: Linear + ReLU
    h = jnp.dot(x_ref[...].astype(cd), w1_ref[...],
                preferred_element_type=jnp.float32)
    h = jnp.maximum(h + b1_ref[...], 0.0)
    # Layer 2: Linear + ReLU
    h = jnp.dot(h.astype(cd), w2_ref[...],
                preferred_element_type=jnp.float32)
    h = jnp.maximum(h + b2_ref[...], 0.0)
    # Layer 3: Linear + Tanh
    h = jnp.dot(h.astype(cd), w3_ref[...],
                preferred_element_type=jnp.float32)
    o_ref[...] = jnp.tanh(h + b3_ref[...]).astype(o_ref.dtype)


def prepare_params(w1, b1, w2, b2, w3, b3, *, compute_dtype=jnp.bfloat16):
    """One-time weight prep (hoisted out of the per-call forward).

    Pads hidden/output feature dims to lane multiples (128) and casts weights
    to the MXU compute dtype.  Zero padding is exact: padded hidden units get
    bias 0 -> relu(0) = 0 and feed zero rows of the next weight; padded output
    columns are sliced off by the wrapper.  W1 keeps its (small) input dim
    unpadded so x never needs a feature-dim pad.
    """
    d_in, d_h = w1.shape
    d_out = w3.shape[1]
    d_h_p = _round_up(d_h, LANE)
    d_out_p = _round_up(d_out, LANE)

    def pad2(a, rows, cols, dtype):
        out = jnp.zeros((rows, cols), dtype)
        return out.at[:a.shape[0], :a.shape[1]].set(a.astype(dtype))

    w1p = pad2(w1, d_in, d_h_p, compute_dtype)
    w2p = pad2(w2, d_h_p, d_h_p, compute_dtype)
    w3p = pad2(w3, d_h_p, d_out_p, compute_dtype)
    b1p = pad2(jnp.reshape(b1, (1, -1)), 1, d_h_p, jnp.float32)
    b2p = pad2(jnp.reshape(b2, (1, -1)), 1, d_h_p, jnp.float32)
    b3p = pad2(jnp.reshape(b3, (1, -1)), 1, d_out_p, jnp.float32)
    return (w1p, b1p, w2p, b2p, w3p, b3p)


def sequential_forward(x, params, *, d_out=None, tile_b=512):
    """Fused forward for Sequential(Linear, ReLU, Linear, ReLU, Linear, Tanh).

    `params` must come from `prepare_params` (pre-padded, pre-cast).
    """
    w1p, b1p, w2p, b2p, w3p, b3p = params
    B, d_in = x.shape
    d_h_p = w1p.shape[1]
    d_out_p = w3p.shape[1]
    if d_out is None:
        d_out = d_out_p
    cd = w1p.dtype
    cbytes = jnp.dtype(cd).itemsize
    xbytes = jnp.dtype(x.dtype).itemsize

    # Balanced batch tiling: minimize padded rows rather than padding up to a
    # whole tile.  bf16 packs 16 rows per vreg, so tiles are 16-row aligned
    # (8 for f32) to keep vregs full and stores unmasked.
    row_align = 16 if cbytes == 2 else 8
    b_aligned = _round_up(B, row_align)
    n_tiles = max(pl.cdiv(b_aligned, tile_b), 1)
    if n_tiles == 1 and b_aligned >= 256:
        n_tiles = 2  # keep both TensorCores busy on v7x ("parallel" batch axis)
    tb = _round_up(pl.cdiv(b_aligned, n_tiles), row_align)
    b_p = n_tiles * tb

    # Generation-aware VMEM budget: double-buffered activation tiles + resident
    # weights (counted 2x to cover the default Buffered(2) allocation) + f32
    # intermediates.  Shrink the batch tile if it would not fit (v7x: 64 MiB).
    vmem_cap = _vmem_capacity_bytes()
    budget = int(0.75 * vmem_cap)

    def footprint(tb_):
        return (2 * tb_ * (d_in * xbytes + d_out_p * cbytes)
                + 2 * (d_in * d_h_p + d_h_p * d_h_p + d_h_p * d_out_p) * cbytes
                + 2 * (2 * d_h_p + d_out_p) * 4
                + 3 * tb_ * d_h_p * 4)

    while footprint(tb) > budget and tb > row_align:
        tb = _round_up(max(tb // 2, row_align), row_align)
        n_tiles = pl.cdiv(b_aligned, tb)
        b_p = n_tiles * tb
    # TODO(synk): if the three resident (padded) weights alone ever exceed the
    # VMEM budget (huge hidden dims), switch to a K-tiled reduction grid axis
    # ("arbitrary") with an f32 VMEM accumulator instead of weight residency.

    vmem_limit = int(min(max(2 * footprint(tb), 32 << 20), budget))
    grid = (n_tiles,)

    # Only the batch rows need padding (feature dim of x stays unpadded).
    xp = x if b_p == B else jnp.zeros((b_p, d_in), x.dtype).at[:B].set(x)

    # Advisory cost estimate for the XLA scheduler.
    flops = 2 * b_p * (d_in * d_h_p + d_h_p * d_h_p + d_h_p * d_out_p)
    transcendentals = b_p * d_out_p
    bytes_accessed = (b_p * d_in * xbytes
                      + sum(int(a.size) * a.dtype.itemsize for a in params)
                      + b_p * d_out_p * cbytes)

    out_padded = pl.pallas_call(
        sequential_mlp_kernel,
        out_shape=jax.ShapeDtypeStruct((b_p, d_out_p), cd),
        grid=grid,
        in_specs=[
            pl.BlockSpec((tb, d_in), lambda i: (i, 0)),        # x: tiled over batch
            pl.BlockSpec((d_in, d_h_p), lambda i: (0, 0)),     # W1: VMEM-resident
            pl.BlockSpec((1, d_h_p), lambda i: (0, 0)),        # b1
            pl.BlockSpec((d_h_p, d_h_p), lambda i: (0, 0)),    # W2
            pl.BlockSpec((1, d_h_p), lambda i: (0, 0)),        # b2
            pl.BlockSpec((d_h_p, d_out_p), lambda i: (0, 0)),  # W3
            pl.BlockSpec((1, d_out_p), lambda i: (0, 0)),      # b3
        ],
        out_specs=pl.BlockSpec((tb, d_out_p), lambda i: (i, 0)),
        compiler_params=pltpu.CompilerParams(
            dimension_semantics=("parallel",),
            vmem_limit_bytes=vmem_limit),
        cost_estimate=pl.CostEstimate(flops=flops,
                                      transcendentals=transcendentals,
                                      bytes_accessed=bytes_accessed),
    )(xp, w1p, b1p, w2p, b2p, w3p, b3p)

    # Slice off batch/feature padding; cast the tiny result back to f32.
    return out_padded[:B, :d_out].astype(jnp.float32)


def init_linear(key, fan_in, fan_out):
    """Synthetic init mimicking the framework's Linear init:
    uniform(-1/sqrt(fan_in), 1/sqrt(fan_in)) for W and b; W stored (in, out)."""
    kw, kb = jax.random.split(key)
    bound = 1.0 / math.sqrt(fan_in)
    w = jax.random.uniform(kw, (fan_in, fan_out), jnp.float32, -bound, bound)
    b = jax.random.uniform(kb, (1, fan_out), jnp.float32, -bound, bound)
    return w, b


def reference_forward(x, w1, b1, w2, b2, w3, b3, compute_dtype=jnp.float32):
    """Pure-JAX reference with the same casting pattern as the kernel."""
    cd = compute_dtype
    h = jnp.dot(x.astype(cd), w1.astype(cd), preferred_element_type=jnp.float32)
    h = jnp.maximum(h + b1, 0.0)
    h = jnp.dot(h.astype(cd), w2.astype(cd), preferred_element_type=jnp.float32)
    h = jnp.maximum(h + b2, 0.0)
    h = jnp.dot(h.astype(cd), w3.astype(cd), preferred_element_type=jnp.float32)
    return jnp.tanh(h + b3)


if __name__ == "__main__":
    # Small shapes consistent with the Sequential MLP: batch=8, in=32, hidden=64, out=16
    B, D_IN, D_H, D_OUT = 8, 32, 64, 16

    key = jax.random.PRNGKey(0)
    kx, k1, k2, k3 = jax.random.split(key, 4)
    x = jax.random.normal(kx, (B, D_IN), jnp.float32)
    w1, b1 = init_linear(k1, D_IN, D_H)
    w2, b2 = init_linear(k2, D_H, D_H)
    w3, b3 = init_linear(k3, D_H, D_OUT)

    # One-time weight prep (hoisted out of the forward).
    params_f32 = jax.block_until_ready(
        prepare_params(w1, b1, w2, b2, w3, b3, compute_dtype=jnp.float32))
    params_bf16 = jax.block_until_ready(
        prepare_params(w1, b1, w2, b2, w3, b3, compute_dtype=jnp.bfloat16))

    fwd = jax.jit(functools.partial(sequential_forward, d_out=D_OUT))

    # 1) f32 path: exact module semantics.
    y32 = jax.block_until_ready(fwd(x, params_f32))
    ref32 = reference_forward(x, w1, b1, w2, b2, w3, b3, jnp.float32)
    assert y32.shape == (B, D_OUT)
    assert jnp.allclose(y32, ref32, atol=1e-4, rtol=1e-4)

    # 2) bf16 MXU path (f32 accumulation, f32 epilogue, bf16 writeback).
    y16 = jax.block_until_ready(fwd(x, params_bf16))
    ref16 = reference_forward(x, w1, b1, w2, b2, w3, b3, jnp.bfloat16)
    assert jnp.allclose(y16, ref16, atol=2e-2, rtol=2e-2)

    # 3) Larger batch exercising the balanced multi-tile grid (2 x 160 rows).
    B2 = 300
    x2 = jax.random.normal(jax.random.PRNGKey(1), (B2, D_IN), jnp.float32)
    y2 = jax.block_until_ready(fwd(x2, params_bf16))
    ref2 = reference_forward(x2, w1, b1, w2, b2, w3, b3, jnp.bfloat16)
    assert y2.shape == (B2, D_OUT)
    assert jnp.allclose(y2, ref2, atol=2e-2, rtol=2e-2)

    print("KERNEL_OK")
</pallas_src>

<mosaic_0001>
module attributes {stable_mosaic.version = 11 : i64} {
  func.func @sequential_mlp_kernel(%arg0: i32, %arg1: memref<8x32xf32, #tpu.memory_space<vmem>>, %arg2: memref<32x128xf32, #tpu.memory_space<vmem>>, %arg3: memref<1x128xf32, #tpu.memory_space<vmem>>, %arg4: memref<128x128xf32, #tpu.memory_space<vmem>>, %arg5: memref<1x128xf32, #tpu.memory_space<vmem>>, %arg6: memref<128x128xf32, #tpu.memory_space<vmem>>, %arg7: memref<1x128xf32, #tpu.memory_space<vmem>>, %arg8: memref<8x128xf32, #tpu.memory_space<vmem>>) attributes {dimension_semantics = [#tpu.dimension_semantics<parallel>], iteration_bounds = array<i64: 1>, scalar_prefetch = 0 : i64, scratch_operands = 0 : i64, tpu.core_type = #tpu.core_type<tc>, window_params = [{transform_indices = @transform_0, window_bounds = array<i64: 8, 32>}, {pipeline_mode = #tpu.pipeline_mode<synchronous>, transform_indices = @transform_1, window_bounds = array<i64: 32, 128>}, {pipeline_mode = #tpu.pipeline_mode<synchronous>, transform_indices = @transform_2, window_bounds = array<i64: 1, 128>}, {pipeline_mode = #tpu.pipeline_mode<synchronous>, transform_indices = @transform_3, window_bounds = array<i64: 128, 128>}, {pipeline_mode = #tpu.pipeline_mode<synchronous>, transform_indices = @transform_4, window_bounds = array<i64: 1, 128>}, {pipeline_mode = #tpu.pipeline_mode<synchronous>, transform_indices = @transform_5, window_bounds = array<i64: 128, 128>}, {pipeline_mode = #tpu.pipeline_mode<synchronous>, transform_indices = @transform_6, window_bounds = array<i64: 1, 128>}, {transform_indices = @transform_7, window_bounds = array<i64: 8, 128>}]} {
    %c0 = arith.constant 0 : index
    %c0_0 = arith.constant 0 : index
    %0 = vector.load %arg1[%c0, %c0_0] : memref<8x32xf32, #tpu.memory_space<vmem>>, vector<8x32xf32>
    %c0_1 = arith.constant 0 : index
    %c0_2 = arith.constant 0 : index
    %1 = vector.load %arg2[%c0_1, %c0_2] : memref<32x128xf32, #tpu.memory_space<vmem>>, vector<32x128xf32>
    %cst = arith.constant dense<0.000000e+00> : vector<8x128xf32>
    %2 = tpu.matmul %0, %1, %cst {dimension_numbers = #tpu.dot_dimension_numbers<[1], [0], [0], [1], [0, 0, 1, 1], [], []>} : vector<8x32xf32>, vector<32x128xf32>, vector<8x128xf32> -> vector<8x128xf32>
    %c0_3 = arith.constant 0 : index
    %c0_4 = arith.constant 0 : index
    %3 = vector.load %arg3[%c0_3, %c0_4] : memref<1x128xf32, #tpu.memory_space<vmem>>, vector<1x128xf32>
    %4 = vector.broadcast %3 : vector<1x128xf32> to vector<8x128xf32>
    %5 = arith.addf %2, %4 : vector<8x128xf32>
    %cst_5 = arith.constant 0.000000e+00 : f32
    %6 = vector.broadcast %cst_5 : f32 to vector<8x128xf32>
    %7 = arith.maximumf %5, %6 : vector<8x128xf32>
    %c0_6 = arith.constant 0 : index
    %c0_7 = arith.constant 0 : index
    %8 = vector.load %arg4[%c0_6, %c0_7] : memref<128x128xf32, #tpu.memory_space<vmem>>, vector<128x128xf32>
    %cst_8 = arith.constant dense<0.000000e+00> : vector<8x128xf32>
    %9 = tpu.matmul %7, %8, %cst_8 {dimension_numbers = #tpu.dot_dimension_numbers<[1], [0], [0], [1], [0, 0, 1, 1], [], []>} : vector<8x128xf32>, vector<128x128xf32>, vector<8x128xf32> -> vector<8x128xf32>
    %c0_9 = arith.constant 0 : index
    %c0_10 = arith.constant 0 : index
    %10 = vector.load %arg5[%c0_9, %c0_10] : memref<1x128xf32, #tpu.memory_space<vmem>>, vector<1x128xf32>
    %11 = vector.broadcast %10 : vector<1x128xf32> to vector<8x128xf32>
    %12 = arith.addf %9, %11 : vector<8x128xf32>
    %cst_11 = arith.constant 0.000000e+00 : f32
    %13 = vector.broadcast %cst_11 : f32 to vector<8x128xf32>
    %14 = arith.maximumf %12, %13 : vector<8x128xf32>
    %c0_12 = arith.constant 0 : index
    %c0_13 = arith.constant 0 : index
    %15 = vector.load %arg6[%c0_12, %c0_13] : memref<128x128xf32, #tpu.memory_space<vmem>>, vector<128x128xf32>
    %cst_14 = arith.constant dense<0.000000e+00> : vector<8x128xf32>
    %16 = tpu.matmul %14, %15, %cst_14 {dimension_numbers = #tpu.dot_dimension_numbers<[1], [0], [0], [1], [0, 0, 1, 1], [], []>} : vector<8x128xf32>, vector<128x128xf32>, vector<8x128xf32> -> vector<8x128xf32>
    %c0_15 = arith.constant 0 : index
    %c0_16 = arith.constant 0 : index
    %17 = vector.load %arg7[%c0_15, %c0_16] : memref<1x128xf32, #tpu.memory_space<vmem>>, vector<1x128xf32>
    %18 = vector.broadcast %17 : vector<1x128xf32> to vector<8x128xf32>
    %19 = arith.addf %16, %18 : vector<8x128xf32>
    %20 = math.tanh %19 : vector<8x128xf32>
    %c0_17 = arith.constant 0 : index
    %c0_18 = arith.constant 0 : index
    %21 = vector.load %arg8[%c0_17, %c0_18] : memref<8x128xf32, #tpu.memory_space<vmem>>, vector<8x128xf32>
    tpu.vector_store %arg8[%c0_17, %c0_18], %20 {strides = array<i32>} : memref<8x128xf32, #tpu.memory_space<vmem>>, vector<8x128xf32>,
    return
  }
  func.func @transform_0(%arg0: i32) -> (i32, i32) {
    %c0_i32 = arith.constant 0 : i32
    %c0_i32_0 = arith.constant 0 : i32
    return %arg0, %c0_i32 : i32, i32
  }
  func.func @transform_1(%arg0: i32) -> (i32, i32) {
    %c0_i32 = arith.constant 0 : i32
    %c0_i32_0 = arith.constant 0 : i32
    %c0_i32_1 = arith.constant 0 : i32
    return %c0_i32, %c0_i32_0 : i32, i32
  }
  func.func @transform_2(%arg0: i32) -> (i32, i32) {
    %c0_i32 = arith.constant 0 : i32
    %c0_i32_0 = arith.constant 0 : i32
    %c0_i32_1 = arith.constant 0 : i32
    return %c0_i32, %c0_i32_0 : i32, i32
  }
  func.func @transform_3(%arg0: i32) -> (i32, i32) {
    %c0_i32 = arith.constant 0 : i32
    %c0_i32_0 = arith.constant 0 : i32
    %c0_i32_1 = arith.constant 0 : i32
    return %c0_i32, %c0_i32_0 : i32, i32
  }
  func.func @transform_4(%arg0: i32) -> (i32, i32) {
    %c0_i32 = arith.constant 0 : i32
    %c0_i32_0 = arith.constant 0 : i32
    %c0_i32_1 = arith.constant 0 : i32
    return %c0_i32, %c0_i32_0 : i32, i32
  }
  func.func @transform_5(%arg0: i32) -> (i32, i32) {
    %c0_i32 = arith.constant 0 : i32
    %c0_i32_0 = arith.constant 0 : i32
    %c0_i32_1 = arith.constant 0 : i32
    return %c0_i32, %c0_i32_0 : i32, i32
  }
  func.func @transform_6(%arg0: i32) -> (i32, i32) {
    %c0_i32 = arith.constant 0 : i32
    %c0_i32_0 = arith.constant 0 : i32
    %c0_i32_1 = arith.constant 0 : i32
    return %c0_i32, %c0_i32_0 : i32, i32
  }
  func.func @transform_7(%arg0: i32) -> (i32, i32) {
    %c0_i32 = arith.constant 0 : i32
    %c0_i32_0 = arith.constant 0 : i32
    return %arg0, %c0_i32 : i32, i32
  }
}

</mosaic_0001>

<llo_original>
// kernel: sequential_forward.1
$region0: #{sequential_forward.1}
  #allocation0 [shape = 'u32[]', space=smem, size = 0x4, offset = 0x4, fixed_abs, tag = 'smem constant byte address 0x4 - core index']
  #allocation1 [shape = 'u32[144,128]{1,0:T(1,128)}', space=vmem, size = 0x12000, scoped, tag = 'internal scratch']
  %s0 = inlined_call_operand.hbm [shape: f32[8,32], index: 0, kind: input, shape index: {}]
  %s1 = inlined_call_operand.hbm [shape: f32[32,128], index: 1, kind: input, shape index: {}]
  %s2 = inlined_call_operand.vmem [shape: f32[1,128], index: 2, kind: input, shape index: {}]
  %s3 = inlined_call_operand.hbm [shape: f32[128,128], index: 3, kind: input, shape index: {}]
  %s4 = inlined_call_operand.vmem [shape: f32[1,128], index: 4, kind: input, shape index: {}]
  %s5 = inlined_call_operand.hbm [shape: f32[128,128], index: 5, kind: input, shape index: {}]
  %s6 = inlined_call_operand.vmem [shape: f32[1,128], index: 6, kind: input, shape index: {}]
  %s7 = inlined_call_operand.hbm [shape: f32[8,128], index: 7, kind: output, shape index: {}]
  %s8 = sld [smem:[#allocation0]]
  $region54: #{sequential_forward.1} parent=0
    _
  %s10 = ssub.s32 1, %s8
  %s11 = scalar_select 0, %s10, %s8
  $region1: #{sequential_forward.1} parent=0
    #allocation2 [shape = 'u8[4096]{0}', space=vmem, size = 0x1000, scoped, tag = 'input window, operand 0, single buffered']
    #allocation3 [shape = 's32[1]{0}', space=sflag, size = 0x4, scoped, tag = 'scoped memory for sequential_forward.1']
    #allocation4 [shape = 's32[1]{0}', space=sflag, size = 0x4, scoped, tag = 'scoped memory for sequential_forward.1']
    #allocation5 [shape = 'u8[16384]{0}', space=vmem, size = 0x4000, scoped, tag = 'input window, operand 1, single buffered']
    #allocation6 [shape = 's32[1]{0}', space=sflag, size = 0x4, scoped, tag = 'scoped memory for sequential_forward.1']
    #allocation7 [shape = 'u8[65536]{0}', space=vmem, size = 0x10000, scoped, tag = 'input window, operand 3, single buffered']
    #allocation8 [shape = 'u8[65536]{0}', space=vmem, size = 0x10000, scoped, tag = 'input window, operand 5, single buffered']
    #allocation9 [shape = 's32[1]{0}', space=sflag, size = 0x4, scoped, tag = 'scoped memory for sequential_forward.1']
    #allocation10 [shape = 'u8[4096]{0}', space=vmem, size = 0x1000, scoped, tag = 'output window, operand 0, single buffered']
    %12 = vsyncpa [#allocation3], 0
    %13 = vsyncpa [#allocation6], 0
    %14 = vsyncpa [#allocation9], 0
    %15 = vsyncpa [#allocation4], 0
    // Predicated region
    $region2: #{sequential_forward.1} parent=1 // pred_check
      _
    $region3: #{sequential_forward.1} parent=1 // pred_check_branch
      %17 = sbr.rel (0) target = $region5
    $region4: #{sequential_forward.1} parent=1 // pred_region
      %s19 = ssub.s32 128, 128
      %20 = vsyncadd [#allocation3], %s19
      %s22 = sshll.u32 [#allocation2], 4
      %s23 = int_to_ptr.vmem [resolvable:$true] %s22
      %25 = dma.hbm_to_vmem [thread:$0]  %s0, 128, %s23, [#allocation3]
    $region5: #{sequential_forward.1} parent=1 // pred_fallthru
      _
    // Predicated region
    $region6: #{sequential_forward.1} parent=1 // pred_check
      _
    $region7: #{sequential_forward.1} parent=1 // pred_check_branch
      %27 = sbr.rel (0) target = $region9
    $region8: #{sequential_forward.1} parent=1 // pred_region
      %s29 = ssub.s32 512, 512
      %30 = vsyncadd [#allocation6], %s29
      %s31 = sshll.u32 [#allocation5], 4
      %s32 = int_to_ptr.vmem [resolvable:$true] %s31
      %37 = dma.hbm_to_vmem [thread:$0]  %s1, 512, %s32, [#allocation6], 128, 128, 8
    $region9: #{sequential_forward.1} parent=1 // pred_fallthru
      _
    // Predicated region
    $region10: #{sequential_forward.1} parent=1 // pred_check
      _
    $region11: #{sequential_forward.1} parent=1 // pred_check_branch
      %39 = sbr.rel (0) target = $region13
    $region12: #{sequential_forward.1} parent=1 // pred_region
      _
    $region13: #{sequential_forward.1} parent=1 // pred_fallthru
      _
    // Predicated region
    $region14: #{sequential_forward.1} parent=1 // pred_check
      _
    $region15: #{sequential_forward.1} parent=1 // pred_check_branch
      %41 = sbr.rel (0) target = $region17
    $region16: #{sequential_forward.1} parent=1 // pred_region
      %s43 = ssub.s32 2048, 2048
      %44 = vsyncadd [#allocation6], %s43
      %s45 = sshll.u32 [#allocation7], 4
      %s46 = int_to_ptr.vmem [resolvable:$true] %s45
      %51 = dma.hbm_to_vmem [thread:$0]  %s3, 2048, %s46, [#allocation6], 128, 128, 8
    $region17: #{sequential_forward.1} parent=1 // pred_fallthru
      _
    // Predicated region
    $region18: #{sequential_forward.1} parent=1 // pred_check
      _
    $region19: #{sequential_forward.1} parent=1 // pred_check_branch
      %53 = sbr.rel (0) target = $region21
    $region20: #{sequential_forward.1} parent=1 // pred_region
      _
    $region21: #{sequential_forward.1} parent=1 // pred_fallthru
      _
    // Predicated region
    $region22: #{sequential_forward.1} parent=1 // pred_check
      _
    $region23: #{sequential_forward.1} parent=1 // pred_check_branch
      %55 = sbr.rel (0) target = $region25
    $region24: #{sequential_forward.1} parent=1 // pred_region
      %s57 = ssub.s32 2048, 2048
      %58 = vsyncadd [#allocation9], %s57
      %s59 = sshll.u32 [#allocation8], 4
      %s60 = int_to_ptr.vmem [resolvable:$true] %s59
      %65 = dma.hbm_to_vmem [thread:$0]  %s5, 2048, %s60, [#allocation9], 128, 128, 8
    $region25: #{sequential_forward.1} parent=1 // pred_fallthru
      _
    // Predicated region
    $region26: #{sequential_forward.1} parent=1 // pred_check
      _
    $region27: #{sequential_forward.1} parent=1 // pred_check_branch
      %67 = sbr.rel (0) target = $region29
    $region28: #{sequential_forward.1} parent=1 // pred_region
      _
    $region29: #{sequential_forward.1} parent=1 // pred_fallthru
      _
    // Predicated region
    $region30: #{sequential_forward.1} parent=1 // pred_check
      _
    $region31: #{sequential_forward.1} parent=1 // pred_check_branch
      %69 = sbr.rel (0) target = $region33
    $region32: #{sequential_forward.1} parent=1 // pred_region
      %70 = dma.done [#allocation3], 128
    $region33: #{sequential_forward.1} parent=1 // pred_fallthru
      _
    // Predicated region
    $region34: #{sequential_forward.1} parent=1 // pred_check
      _
    $region35: #{sequential_forward.1} parent=1 // pred_check_branch
      %72 = sbr.rel (0) target = $region37
    $region36: #{sequential_forward.1} parent=1 // pred_region
      %73 = dma.done [#allocation6], 512
    $region37: #{sequential_forward.1} parent=1 // pred_fallthru
      _
    // Predicated region
    $region38: #{sequential_forward.1} parent=1 // pred_check
      _
    $region39: #{sequential_forward.1} parent=1 // pred_check_branch
      %75 = sbr.rel (0) target = $region41
    $region40: #{sequential_forward.1} parent=1 // pred_region
      %76 = dma.done [#allocation6], 2048
    $region41: #{sequential_forward.1} parent=1 // pred_fallthru
      _
    // Predicated region
    $region42: #{sequential_forward.1} parent=1 // pred_check
      _
    $region43: #{sequential_forward.1} parent=1 // pred_check_branch
      %78 = sbr.rel (0) target = $region45
    $region44: #{sequential_forward.1} parent=1 // pred_region
      %79 = dma.done [#allocation9], 2048
    $region45: #{sequential_forward.1} parent=1 // pred_fallthru
      _
    %v80 = vld [vmem:[#allocation2] sm:$0xff]
    %v81 = vld [vmem:[#allocation5] sm:$0xff]
    %v82 = vld [vmem:[#allocation5 + $0x8] sm:$0xff]
    %v83 = vld [vmem:[#allocation5 + $0x10] sm:$0xff]
    %v84 = vld [vmem:[#allocation5 + $0x18] sm:$0xff]
    %v85 = vld [vmem:[%s2] sm:$0x1]
    %v87 = vlaneseq
    %v88 = vshrl.u32 %v87, 7
    %v89 = vsub.s32 0, %v88
    %v90 = vrot.slane %v85, %v89
    %vm92 = vcmask 261120
    %v94 = vsel %vm92, %v80, 0
    %96 = vmatprep.subr.mxu0 0.0
    %97 = vmatpush1.msra.mxu0 %v81
    %98 = vmatprep.subr.mxu0 0.0
    %99 = vmatpush1.msra.mxu0 %v82
    %100 = vmatprep.subr.mxu0 0.0
    %101 = vmatpush1.msra.mxu0 %v83
    %102 = vmatprep.subr.mxu0 0.0
    %103 = vmatpush1.msra.mxu0 %v84
    %104 = vmatprep.subr.mxu0 0.0
    %105 = vmatpush1.msra.mxu0 0.0
    %106 = vmatprep.subr.mxu0 0.0
    %107 = vmatpush1.msra.mxu0 0.0
    %108 = vmatprep.subr.mxu0 0.0
    %109 = vmatpush1.msra.mxu0 0.0
    %110 = vmatprep.subr.mxu0 0.0
    %111 = vmatpush1.msra.mxu0 0.0
    %112 = vmatprep.subr.mxu0 0.0
    %113 = vmatpush1.msra.mxu0 0.0
    %114 = vmatprep.subr.mxu0 0.0
    %115 = vmatpush1.msra.mxu0 0.0
    %116 = vmatprep.subr.mxu0 0.0
    %117 = vmatpush1.msra.mxu0 0.0
    %118 = vmatprep.subr.mxu0 0.0
    %119 = vmatpush1.msra.mxu0 0.0
    %120 = vmatprep.subr.mxu0 0.0
    %121 = vmatpush1.msra.mxu0 0.0
    %122 = vmatprep.subr.mxu0 0.0
    %123 = vmatpush1.msra.mxu0 0.0
    %124 = vmatprep.subr.mxu0 0.0
    %125 = vmatpush1.msra.mxu0 0.0
    %126 = vmatprep.subr.mxu0 0.0
    %127 = vmatpush1.msra.mxu0 0.0
    %128 = vmatprep.subr.mxu0 0.0
    %129 = vmatpush1.msra.mxu0 0.0
    %130 = vmatprep.subr.mxu0 0.0
    %131 = vmatpush1.msra.mxu0 0.0
    %132 = vmatprep.subr.mxu0 0.0
    %133 = vmatpush1.msra.mxu0 0.0
    %134 = vmatprep.subr.mxu0 0.0
    %135 = vmatpush1.msra.mxu0 0.0
    %136 = vmatprep.subr.mxu0 0.0
    %137 = vmatpush1.msra.mxu0 0.0
    %138 = vmatprep.subr.mxu0 0.0
    %139 = vmatpush1.msra.mxu0 0.0
    %140 = vmatprep.subr.mxu0 0.0
    %141 = vmatpush1.msra.mxu0 0.0
    %142 = vmatprep.subr.mxu0 0.0
    %143 = vmatpush1.msra.mxu0 0.0
    %144 = vmatprep.subr.mxu0 0.0
    %145 = vmatpush1.msra.mxu0 0.0
    %146 = vmatprep.subr.mxu0 0.0
    %147 = vmatpush1.msra.mxu0 0.0
    %148 = vmatprep.subr.mxu0 0.0
    %149 = vmatpush1.msra.mxu0 0.0
    %150 = vmatprep.subr.mxu0 0.0
    %151 = vmatpush1.msra.mxu0 0.0
    %152 = vmatprep.subr.mxu0 0.0
    %153 = vmatpush1.msra.mxu0 0.0
    %154 = vmatprep.subr.mxu0 0.0
    %155 = vmatpush1.msra.mxu0 0.0
    %156 = vmatprep.subr.mxu0 0.0
    %157 = vmatpush1.msra.mxu0 0.0
    %158 = vmatprep.subr.mxu0 0.0
    %159 = vmatpush1.msra.mxu0 0.0
    %160 = vmatprep.mubr.f32.mxu0 0.0
    %161 = vmatmul.mubr.f32.gmra.mrb[0].mxu0 %v94
    %v162 = vpop.f32.mrb[0].mxu0
    %v163 = vadd.f32 %v90, %v162
    %v164 = vpop.f32.mrb[0].mxu0
    %165 = vdwg.mxu0
    %v166 = vmax.f32 %v163, 0.0
    %v167 = vld [vmem:[#allocation7] sm:$0xff]
    %v168 = vld [vmem:[#allocation7 + $0x8] sm:$0xff]
    %v169 = vld [vmem:[#allocation7 + $0x10] sm:$0xff]
    %v170 = vld [vmem:[#allocation7 + $0x18] sm:$0xff]
    %v171 = vld [vmem:[#allocation7 + $0x20] sm:$0xff]
    %v172 = vld [vmem:[#allocation7 + $0x28] sm:$0xff]
    %v173 = vld [vmem:[#allocation7 + $0x30] sm:$0xff]
    %v174 = vld [vmem:[#allocation7 + $0x38] sm:$0xff]
    %v175 = vld [vmem:[#allocation7 + $0x40] sm:$0xff]
    %v176 = vld [vmem:[#allocation7 + $0x48] sm:$0xff]
    %v177 = vld [vmem:[#allocation7 + $0x50] sm:$0xff]
    %v178 = vld [vmem:[#allocation7 + $0x58] sm:$0xff]
    %v179 = vld [vmem:[#allocation7 + $0x60] sm:$0xff]
    %v180 = vld [vmem:[#allocation7 + $0x68] sm:$0xff]
    %v181 = vld [vmem:[#allocation7 + $0x70] sm:$0xff]
    %v182 = vld [vmem:[#allocation7 + $0x78] sm:$0xff]
    %v183 = vld [vmem:[%s4] sm:$0x1]
    %v185 = vlaneseq
    %v186 = vshrl.u32 %v185, 7
    %v187 = vsub.s32 0, %v186
    %v188 = vrot.slane %v183, %v187
    %190 = vmatprep.subr.mxu0 0.0
    %191 = vmatpush1.msra.mxu0 %v167
    %192 = vmatprep.subr.mxu0 0.0
    %193 = vmatpush1.msra.mxu0 %v168
    %194 = vmatprep.subr.mxu0 0.0
    %195 = vmatpush1.msra.mxu0 %v169
    %196 = vmatprep.subr.mxu0 0.0
    %197 = vmatpush1.msra.mxu0 %v170
    %198 = vmatprep.subr.mxu0 0.0
    %199 = vmatpush1.msra.mxu0 %v171
    %200 = vmatprep.subr.mxu0 0.0
    %201 = vmatpush1.msra.mxu0 %v172
    %202 = vmatprep.subr.mxu0 0.0
    %203 = vmatpush1.msra.mxu0 %v173
    %204 = vmatprep.subr.mxu0 0.0
    %205 = vmatpush1.msra.mxu0 %v174
    %206 = vmatprep.subr.mxu0 0.0
    %207 = vmatpush1.msra.mxu0 %v175
    %208 = vmatprep.subr.mxu0 0.0
    %209 = vmatpush1.msra.mxu0 %v176
    %210 = vmatprep.subr.mxu0 0.0
    %211 = vmatpush1.msra.mxu0 %v177
    %212 = vmatprep.subr.mxu0 0.0
    %213 = vmatpush1.msra.mxu0 %v178
    %214 = vmatprep.subr.mxu0 0.0
    %215 = vmatpush1.msra.mxu0 %v179
    %216 = vmatprep.subr.mxu0 0.0
    %217 = vmatpush1.msra.mxu0 %v180
    %218 = vmatprep.subr.mxu0 0.0
    %219 = vmatpush1.msra.mxu0 %v181
    %220 = vmatprep.subr.mxu0 0.0
    %221 = vmatpush1.msra.mxu0 %v182
    %222 = vmatprep.subr.mxu0 0.0
    %223 = vmatpush1.msra.mxu0 0.0
    %224 = vmatprep.subr.mxu0 0.0
    %225 = vmatpush1.msra.mxu0 0.0
    %226 = vmatprep.subr.mxu0 0.0
    %227 = vmatpush1.msra.mxu0 0.0
    %228 = vmatprep.subr.mxu0 0.0
    %229 = vmatpush1.msra.mxu0 0.0
    %230 = vmatprep.subr.mxu0 0.0
    %231 = vmatpush1.msra.mxu0 0.0
    %232 = vmatprep.subr.mxu0 0.0
    %233 = vmatpush1.msra.mxu0 0.0
    %234 = vmatprep.subr.mxu0 0.0
    %235 = vmatpush1.msra.mxu0 0.0
    %236 = vmatprep.subr.mxu0 0.0
    %237 = vmatpush1.msra.mxu0 0.0
    %238 = vmatprep.subr.mxu0 0.0
    %239 = vmatpush1.msra.mxu0 0.0
    %240 = vmatprep.subr.mxu0 0.0
    %241 = vmatpush1.msra.mxu0 0.0
    %242 = vmatprep.subr.mxu0 0.0
    %243 = vmatpush1.msra.mxu0 0.0
    %244 = vmatprep.subr.mxu0 0.0
    %245 = vmatpush1.msra.mxu0 0.0
    %246 = vmatprep.subr.mxu0 0.0
    %247 = vmatpush1.msra.mxu0 0.0
    %248 = vmatprep.subr.mxu0 0.0
    %249 = vmatpush1.msra.mxu0 0.0
    %250 = vmatprep.subr.mxu0 0.0
    %251 = vmatpush1.msra.mxu0 0.0
    %252 = vmatprep.subr.mxu0 0.0
    %253 = vmatpush1.msra.mxu0 0.0
    %254 = vmatprep.mubr.f32.mxu0 0.0
    %255 = vmatmul.mubr.f32.gmra.mrb[0].mxu0 %v166
    %v256 = vpop.f32.mrb[0].mxu0
    %v257 = vadd.f32 %v188, %v256
    %v258 = vpop.f32.mrb[0].mxu0
    %259 = vdwg.mxu0
    %v260 = vmax.f32 %v257, 0.0
    %v261 = vld [vmem:[#allocation8] sm:$0xff]
    %v262 = vld [vmem:[#allocation8 + $0x8] sm:$0xff]
    %v263 = vld [vmem:[#allocation8 + $0x10] sm:$0xff]
    %v264 = vld [vmem:[#allocation8 + $0x18] sm:$0xff]
    %v265 = vld [vmem:[#allocation8 + $0x20] sm:$0xff]
    %v266 = vld [vmem:[#allocation8 + $0x28] sm:$0xff]
    %v267 = vld [vmem:[#allocation8 + $0x30] sm:$0xff]
    %v268 = vld [vmem:[#allocation8 + $0x38] sm:$0xff]
    %v269 = vld [vmem:[#allocation8 + $0x40] sm:$0xff]
    %v270 = vld [vmem:[#allocation8 + $0x48] sm:$0xff]
    %v271 = vld [vmem:[#allocation8 + $0x50] sm:$0xff]
    %v272 = vld [vmem:[#allocation8 + $0x58] sm:$0xff]
    %v273 = vld [vmem:[#allocation8 + $0x60] sm:$0xff]
    %v274 = vld [vmem:[#allocation8 + $0x68] sm:$0xff]
    %v275 = vld [vmem:[#allocation8 + $0x70] sm:$0xff]
    %v276 = vld [vmem:[#allocation8 + $0x78] sm:$0xff]
    %v277 = vld [vmem:[%s6] sm:$0x1]
    %v279 = vlaneseq
    %v280 = vshrl.u32 %v279, 7
    %v281 = vsub.s32 0, %v280
    %v282 = vrot.slane %v277, %v281
    %284 = vmatprep.subr.mxu0 0.0
    %285 = vmatpush1.msra.mxu0 %v261
    %286 = vmatprep.subr.mxu0 0.0
    %287 = vmatpush1.msra.mxu0 %v262
    %288 = vmatprep.subr.mxu0 0.0
    %289 = vmatpush1.msra.mxu0 %v263
    %290 = vmatprep.subr.mxu0 0.0
    %291 = vmatpush1.msra.mxu0 %v264
    %292 = vmatprep.subr.mxu0 0.0
    %293 = vmatpush1.msra.mxu0 %v265
    %294 = vmatprep.subr.mxu0 0.0
    %295 = vmatpush1.msra.mxu0 %v266
    %296 = vmatprep.subr.mxu0 0.0
    %297 = vmatpush1.msra.mxu0 %v267
    %298 = vmatprep.subr.mxu0 0.0
    %299 = vmatpush1.msra.mxu0 %v268
    %300 = vmatprep.subr.mxu0 0.0
    %301 = vmatpush1.msra.mxu0 %v269
    %302 = vmatprep.subr.mxu0 0.0
    %303 = vmatpush1.msra.mxu0 %v270
    %304 = vmatprep.subr.mxu0 0.0
    %305 = vmatpush1.msra.mxu0 %v271
    %306 = vmatprep.subr.mxu0 0.0
    %307 = vmatpush1.msra.mxu0 %v272
    %308 = vmatprep.subr.mxu0 0.0
    %309 = vmatpush1.msra.mxu0 %v273
    %310 = vmatprep.subr.mxu0 0.0
    %311 = vmatpush1.msra.mxu0 %v274
    %312 = vmatprep.subr.mxu0 0.0
    %313 = vmatpush1.msra.mxu0 %v275
    %314 = vmatprep.subr.mxu0 0.0
    %315 = vmatpush1.msra.mxu0 %v276
    %316 = vmatprep.subr.mxu0 0.0
    %317 = vmatpush1.msra.mxu0 0.0
    %318 = vmatprep.subr.mxu0 0.0
    %319 = vmatpush1.msra.mxu0 0.0
    %320 = vmatprep.subr.mxu0 0.0
    %321 = vmatpush1.msra.mxu0 0.0
    %322 = vmatprep.subr.mxu0 0.0
    %323 = vmatpush1.msra.mxu0 0.0
    %324 = vmatprep.subr.mxu0 0.0
    %325 = vmatpush1.msra.mxu0 0.0
    %326 = vmatprep.subr.mxu0 0.0
    %327 = vmatpush1.msra.mxu0 0.0
    %328 = vmatprep.subr.mxu0 0.0
    %329 = vmatpush1.msra.mxu0 0.0
    %330 = vmatprep.subr.mxu0 0.0
    %331 = vmatpush1.msra.mxu0 0.0
    %332 = vmatprep.subr.mxu0 0.0
    %333 = vmatpush1.msra.mxu0 0.0
    %334 = vmatprep.subr.mxu0 0.0
    %335 = vmatpush1.msra.mxu0 0.0
    %336 = vmatprep.subr.mxu0 0.0
    %337 = vmatpush1.msra.mxu0 0.0
    %338 = vmatprep.subr.mxu0 0.0
    %339 = vmatpush1.msra.mxu0 0.0
    %340 = vmatprep.subr.mxu0 0.0
    %341 = vmatpush1.msra.mxu0 0.0
    %342 = vmatprep.subr.mxu0 0.0
    %343 = vmatpush1.msra.mxu0 0.0
    %344 = vmatprep.subr.mxu0 0.0
    %345 = vmatpush1.msra.mxu0 0.0
    %346 = vmatprep.subr.mxu0 0.0
    %347 = vmatpush1.msra.mxu0 0.0
    %348 = vmatprep.mubr.f32.mxu0 0.0
    %349 = vmatmul.mubr.f32.gmra.mrb[0].mxu0 %v260
    %v350 = vpop.f32.mrb[0].mxu0
    %v351 = vadd.f32 %v282, %v350
    %v352 = vpop.f32.mrb[0].mxu0
    %353 = vdwg.mxu0
    %v354 = vtanh.pop %v351
    %355 = vst [vmem:[#allocation10] sm:$0xff] %v354
    // Predicated region
    $region46: #{sequential_forward.1} parent=1 // pred_check
      _
    $region47: #{sequential_forward.1} parent=1 // pred_check_branch
      %357 = sbr.rel (0) target = $region49
    $region48: #{sequential_forward.1} parent=1 // pred_region
      %s359 = ssub.s32 128, 128
      %360 = vsyncadd [#allocation4], %s359
      %s362 = sshll.u32 [#allocation10], 4
      %s363 = int_to_ptr.vmem [resolvable:$true] %s362
      %365 = dma.vmem_to_hbm [thread:$0]  %s363, 128, %s7, [#allocation4]
    $region49: #{sequential_forward.1} parent=1 // pred_fallthru
      _
    // Predicated region
    $region50: #{sequential_forward.1} parent=1 // pred_check
      _
    $region51: #{sequential_forward.1} parent=1 // pred_check_branch
      %367 = sbr.rel (0) target = $region53
    $region52: #{sequential_forward.1} parent=1 // pred_region
      %368 = dma.done [#allocation4], 128
    $region53: #{sequential_forward.1} parent=1 // pred_fallthru
      _
    %369 = vsyncpa [#allocation3], 1
    %370 = vsyncpa [#allocation6], 1
    %371 = vsyncpa [#allocation9], 1
    %372 = vsyncpa [#allocation4], 1

</llo_original>
